<compile_context>
chip_gen: v7x
topology: tpu7x:2x2x1
jax: 0.10.0
libtpu: 0.0.40
codegen_flags: <defaults>
</compile_context>

<pallas_src>
import functools

import jax
import jax.numpy as jnp
from jax.experimental import pallas as pl
from jax.experimental.pallas import tpu as pltpu


# ---------------------------------------------------------------------------
# Fused conv1 + ReLU + conv2 + ReLU kernel: TB images per grid step
# ---------------------------------------------------------------------------
def _conv_kernel(x_ref, w1_ref, b1_ref, w2_ref, b2_ref, o_ref, patches_ref,
                 *, H, W, TB, C1, C2):
    """x_ref:(1,1,NLX) f32   w1_ref:(C1,9) f32   b1_ref:(C1,1) f32
    w2_ref:(C2,9*C1) bf16    b2_ref:(C2,1) f32
    o_ref:(1,TB,C2,H*W) bf16 patches_ref:(9*C1, TB*H*W) f32 VMEM scratch.

    The lane axis carries batch*spatial merged as L = b*H*W + h*W + w, so a
    3x3 window shift is just a static lane offset (kh*W + kw).  Positions
    whose window crosses an image/row boundary are garbage, but they are
    never read for valid conv outputs and the FC weight is zero there.
    """
    HW = H * W
    NL = TB * HW               # merged batch*spatial lanes
    extra = 2 * W + 2          # max window offset
    NL1 = NL + extra           # conv1 output length (tail feeds conv2 windows)

    x = x_ref[0]                                      # (1, NLX) f32
    xb = jnp.broadcast_to(x, (C1, x.shape[-1]))       # channels on sublanes
    w1 = w1_ref[...]                                  # (C1, 9)

    # -------- conv1 + bias + ReLU: 9 shifted FMAs on the VPU, all channels --
    acc = jnp.zeros((C1, NL1), jnp.float32)
    for kh in range(3):
        for kw in range(3):
            t = kh * 3 + kw
            off = kh * W + kw
            acc = acc + w1[:, t:t + 1] * xb[:, off:off + NL1]
    y1 = jnp.maximum(acc + b1_ref[...], 0.0)          # (C1, NL1)

    # -------- conv2: im2col along sublanes (tile-aligned 8-row stores) ------
    for kh in range(3):
        for kw in range(3):
            t = kh * 3 + kw
            off = kh * W + kw
            patches_ref[t * C1:(t + 1) * C1, :] = y1[:, off:off + NL]

    patches = patches_ref[...].astype(jnp.bfloat16)   # (9*C1, NL)
    y2 = jnp.dot(w2_ref[...], patches,
                 preferred_element_type=jnp.float32)  # (C2, NL) f32
    y2 = jnp.maximum(y2 + b2_ref[...], 0.0).astype(jnp.bfloat16)

    # -------- one lane-dense (C2, H*W) store per image ----------------------
    for b in range(TB):
        o_ref[0, b] = y2[:, b * HW:(b + 1) * HW]


# ---------------------------------------------------------------------------
# One-time weight preparation (layout + dtype), hoisted out of the hot path
# ---------------------------------------------------------------------------
def prepare_encoder_params(w1, b1, w2, b2, wfc, bfc, height, width):
    """Torch layouts in: w1 (8,1,3,3), w2 (64,8,3,3), wfc (hidden, P*64)."""
    C1, C2 = w1.shape[0], w2.shape[0]
    hidden = wfc.shape[0]
    H2, W2 = height - 4, width - 4
    # conv1 taps as (C1, 9), tap index t = kh*3 + kw
    w1_k = w1[:, 0].reshape(C1, 9).astype(jnp.float32)
    b1_k = b1.reshape(C1, 1).astype(jnp.float32)
    # conv2 im2col weight: columns ordered (kh, kw, cin) to match the kernel
    w2_k = jnp.transpose(w2, (0, 2, 3, 1)).reshape(C2, 9 * C1).astype(jnp.bfloat16)
    b2_k = b2.reshape(C2, 1).astype(jnp.float32)
    # fc weight laid over the full HxW grid (zeros at conv-invalid positions),
    # K ordered (c, h, w) to match the kernel's (C2, H*W) output tiles.
    wfc_r = wfc.reshape(hidden, C2, H2, W2).astype(jnp.float32)
    wfc_grid = jnp.zeros((hidden, C2, height, width), jnp.float32)
    wfc_grid = wfc_grid.at[:, :, :H2, :W2].set(wfc_r)
    wfc_k = wfc_grid.reshape(hidden, C2 * height * width).T.astype(jnp.bfloat16)
    bfc_k = bfc.reshape(1, hidden).astype(jnp.float32)
    return w1_k, b1_k, w2_k, b2_k, wfc_k, bfc_k


# ---------------------------------------------------------------------------
# Forward wrapper: one pallas_call (convs) + one batched FC GEMM
# ---------------------------------------------------------------------------
def encoder_forward(x_nchw, params, *, block_batch=8):
    w1_k, b1_k, w2_k, b2_k, wfc_k, bfc_k = params
    B = int(x_nchw.shape[0])
    H, W = int(x_nchw.shape[2]), int(x_nchw.shape[3])
    C1, C2 = int(w1_k.shape[0]), int(w2_k.shape[0])
    HW = H * W

    tb = int(max(1, min(block_batch, B)))
    g = (B + tb - 1) // tb
    bp = g * tb

    extra = 2 * W + 2
    lane_pad = ((2 * extra + 127) // 128) * 128
    nl = tb * HW
    nlx = nl + lane_pad

    # NCHW (C=1) -> one lane-dense row per batch group (free reshapes + a pad).
    x_flat = x_nchw.astype(jnp.float32).reshape(B, HW)
    if bp != B:
        x_flat = jnp.concatenate(
            [x_flat, jnp.zeros((bp - B, HW), jnp.float32)], axis=0)
    xg = jnp.pad(x_flat.reshape(g, nl), ((0, 0), (0, lane_pad)))
    xg = xg.reshape(g, 1, nlx)

    kernel = functools.partial(_conv_kernel, H=H, W=W, TB=tb, C1=C1, C2=C2)

    y = pl.pallas_call(
        kernel,
        out_shape=jax.ShapeDtypeStruct((g, tb, C2, HW), jnp.bfloat16),
        grid=(g,),
        in_specs=[
            pl.BlockSpec((1, 1, nlx), lambda i: (i, 0, 0)),
            pl.BlockSpec((C1, 9), lambda i: (0, 0)),
            pl.BlockSpec((C1, 1), lambda i: (0, 0)),
            pl.BlockSpec((C2, 9 * C1), lambda i: (0, 0)),
            pl.BlockSpec((C2, 1), lambda i: (0, 0)),
        ],
        out_specs=pl.BlockSpec((1, tb, C2, HW), lambda i: (i, 0, 0, 0)),
        scratch_shapes=[pltpu.VMEM((9 * C1, nl), jnp.float32)],
        compiler_params=pltpu.CompilerParams(
            dimension_semantics=("parallel",)),
    )(xg, w1_k, b1_k, w2_k, b2_k)

    # FC: one (B, C2*H*W) x (C2*H*W, hidden) GEMM; the reshape is free because
    # the kernel already emitted per-image (C2, H*W) tiles in that order.
    feats = y.reshape(bp, C2 * HW)[:B]
    out = jnp.dot(feats, wfc_k, preferred_element_type=jnp.float32) + bfc_k
    return out


# ---------------------------------------------------------------------------
# Pure-JAX reference mirroring the PyTorch module exactly (for validation)
# ---------------------------------------------------------------------------
def encoder_reference(x, w1, b1, w2, b2, wfc, bfc):
    dn = ("NCHW", "OIHW", "NCHW")
    y = jax.lax.conv_general_dilated(x, w1, (1, 1), "VALID", dimension_numbers=dn)
    y = jnp.maximum(y + b1[None, :, None, None], 0.0)
    y = jax.lax.conv_general_dilated(y, w2, (1, 1), "VALID", dimension_numbers=dn)
    y = jnp.maximum(y + b2[None, :, None, None], 0.0)
    y = y.reshape(y.shape[0], -1)
    return y @ wfc.T + bfc[None, :]


# ---------------------------------------------------------------------------
if __name__ == "__main__":
    B, HEIGHT, WIDTH, HIDDEN = 2, 16, 16, 32
    FLAT = (WIDTH - 4) * (HEIGHT - 4) * 64  # 9216

    key = jax.random.PRNGKey(0)
    ks = jax.random.split(key, 7)
    x = jax.random.normal(ks[0], (B, 1, HEIGHT, WIDTH), jnp.float32)
    w1 = jax.random.normal(ks[1], (8, 1, 3, 3), jnp.float32) * 0.1
    b1 = jax.random.normal(ks[2], (8,), jnp.float32) * 0.1
    w2 = jax.random.normal(ks[3], (64, 8, 3, 3), jnp.float32) * 0.05
    b2 = jax.random.normal(ks[4], (64,), jnp.float32) * 0.05
    wfc = jax.random.normal(ks[5], (HIDDEN, FLAT), jnp.float32) * 0.01
    bfc = jax.random.normal(ks[6], (HIDDEN,), jnp.float32) * 0.01

    params = prepare_encoder_params(w1, b1, w2, b2, wfc, bfc, HEIGHT, WIDTH)
    params = jax.block_until_ready(params)

    out = jax.jit(encoder_forward)(x, params)
    out = jax.block_until_ready(out)

    ref = encoder_reference(x, w1, b1, w2, b2, wfc, bfc)
    assert out.shape == (B, HIDDEN), out.shape
    # bf16 MXU operands / bf16 activations with f32 accumulation.
    assert jnp.allclose(out, ref, atol=2e-2, rtol=2e-2), "mismatch vs reference"

    print("KERNEL_OK")
</pallas_src>

<mosaic_0001>
module attributes {stable_mosaic.version = 11 : i64} {
  func.func @_conv_kernel(%arg0: i32, %arg1: memref<1x1x640xf32, #tpu.memory_space<vmem>>, %arg2: memref<8x9xf32, #tpu.memory_space<vmem>>, %arg3: memref<8x1xf32, #tpu.memory_space<vmem>>, %arg4: memref<64x72xbf16, #tpu.memory_space<vmem>>, %arg5: memref<64x1xf32, #tpu.memory_space<vmem>>, %arg6: memref<1x2x64x256xbf16, #tpu.memory_space<vmem>>, %arg7: memref<72x512xf32, #tpu.memory_space<vmem>>) attributes {dimension_semantics = [#tpu.dimension_semantics<parallel>], iteration_bounds = array<i64: 1>, scalar_prefetch = 0 : i64, scratch_operands = 1 : i64, tpu.core_type = #tpu.core_type<tc>, window_params = [{transform_indices = @transform_0, window_bounds = array<i64: 1, 1, 640>}, {pipeline_mode = #tpu.pipeline_mode<synchronous>, transform_indices = @transform_1, window_bounds = array<i64: 8, 9>}, {pipeline_mode = #tpu.pipeline_mode<synchronous>, transform_indices = @transform_2, window_bounds = array<i64: 8, 1>}, {pipeline_mode = #tpu.pipeline_mode<synchronous>, transform_indices = @transform_3, window_bounds = array<i64: 64, 72>}, {pipeline_mode = #tpu.pipeline_mode<synchronous>, transform_indices = @transform_4, window_bounds = array<i64: 64, 1>}, {transform_indices = @transform_5, window_bounds = array<i64: 1, 2, 64, 256>}]} {
    %c0 = arith.constant 0 : index
    %c0_0 = arith.constant 0 : index
    %c0_1 = arith.constant 0 : index
    %0 = vector.load %arg1[%c0, %c0_0, %c0_1] : memref<1x1x640xf32, #tpu.memory_space<vmem>>, vector<1x1x640xf32>
    %1 = vector.shape_cast %0 : vector<1x1x640xf32> to vector<1x640xf32>
    %2 = vector.shape_cast %1 : vector<1x640xf32> to vector<1x640xf32>
    %3 = vector.broadcast %2 : vector<1x640xf32> to vector<8x640xf32>
    %c0_2 = arith.constant 0 : index
    %c0_3 = arith.constant 0 : index
    %4 = vector.load %arg2[%c0_2, %c0_3] : memref<8x9xf32, #tpu.memory_space<vmem>>, vector<8x9xf32>
    %cst = arith.constant 0.000000e+00 : f32
    %5 = vector.broadcast %cst : f32 to vector<8x546xf32>
    %6 = vector.extract_strided_slice %4 {offsets = [0, 0], sizes = [8, 1], strides = [1, 1]} : vector<8x9xf32> to vector<8x1xf32>
    %7 = vector.extract_strided_slice %3 {offsets = [0, 0], sizes = [8, 546], strides = [1, 1]} : vector<8x640xf32> to vector<8x546xf32>
    %8 = vector.broadcast %6 : vector<8x1xf32> to vector<8x546xf32>
    %9 = arith.mulf %8, %7 : vector<8x546xf32>
    %10 = arith.addf %5, %9 : vector<8x546xf32>
    %11 = vector.extract_strided_slice %4 {offsets = [0, 1], sizes = [8, 1], strides = [1, 1]} : vector<8x9xf32> to vector<8x1xf32>
    %12 = vector.extract_strided_slice %3 {offsets = [0, 1], sizes = [8, 546], strides = [1, 1]} : vector<8x640xf32> to vector<8x546xf32>
    %13 = vector.broadcast %11 : vector<8x1xf32> to vector<8x546xf32>
    %14 = arith.mulf %13, %12 : vector<8x546xf32>
    %15 = arith.addf %10, %14 : vector<8x546xf32>
    %16 = vector.extract_strided_slice %4 {offsets = [0, 2], sizes = [8, 1], strides = [1, 1]} : vector<8x9xf32> to vector<8x1xf32>
    %17 = vector.extract_strided_slice %3 {offsets = [0, 2], sizes = [8, 546], strides = [1, 1]} : vector<8x640xf32> to vector<8x546xf32>
    %18 = vector.broadcast %16 : vector<8x1xf32> to vector<8x546xf32>
    %19 = arith.mulf %18, %17 : vector<8x546xf32>
    %20 = arith.addf %15, %19 : vector<8x546xf32>
    %21 = vector.extract_strided_slice %4 {offsets = [0, 3], sizes = [8, 1], strides = [1, 1]} : vector<8x9xf32> to vector<8x1xf32>
    %22 = vector.extract_strided_slice %3 {offsets = [0, 16], sizes = [8, 546], strides = [1, 1]} : vector<8x640xf32> to vector<8x546xf32>
    %23 = vector.broadcast %21 : vector<8x1xf32> to vector<8x546xf32>
    %24 = arith.mulf %23, %22 : vector<8x546xf32>
    %25 = arith.addf %20, %24 : vector<8x546xf32>
    %26 = vector.extract_strided_slice %4 {offsets = [0, 4], sizes = [8, 1], strides = [1, 1]} : vector<8x9xf32> to vector<8x1xf32>
    %27 = vector.extract_strided_slice %3 {offsets = [0, 17], sizes = [8, 546], strides = [1, 1]} : vector<8x640xf32> to vector<8x546xf32>
    %28 = vector.broadcast %26 : vector<8x1xf32> to vector<8x546xf32>
    %29 = arith.mulf %28, %27 : vector<8x546xf32>
    %30 = arith.addf %25, %29 : vector<8x546xf32>
    %31 = vector.extract_strided_slice %4 {offsets = [0, 5], sizes = [8, 1], strides = [1, 1]} : vector<8x9xf32> to vector<8x1xf32>
    %32 = vector.extract_strided_slice %3 {offsets = [0, 18], sizes = [8, 546], strides = [1, 1]} : vector<8x640xf32> to vector<8x546xf32>
    %33 = vector.broadcast %31 : vector<8x1xf32> to vector<8x546xf32>
    %34 = arith.mulf %33, %32 : vector<8x546xf32>
    %35 = arith.addf %30, %34 : vector<8x546xf32>
    %36 = vector.extract_strided_slice %4 {offsets = [0, 6], sizes = [8, 1], strides = [1, 1]} : vector<8x9xf32> to vector<8x1xf32>
    %37 = vector.extract_strided_slice %3 {offsets = [0, 32], sizes = [8, 546], strides = [1, 1]} : vector<8x640xf32> to vector<8x546xf32>
    %38 = vector.broadcast %36 : vector<8x1xf32> to vector<8x546xf32>
    %39 = arith.mulf %38, %37 : vector<8x546xf32>
    %40 = arith.addf %35, %39 : vector<8x546xf32>
    %41 = vector.extract_strided_slice %4 {offsets = [0, 7], sizes = [8, 1], strides = [1, 1]} : vector<8x9xf32> to vector<8x1xf32>
    %42 = vector.extract_strided_slice %3 {offsets = [0, 33], sizes = [8, 546], strides = [1, 1]} : vector<8x640xf32> to vector<8x546xf32>
    %43 = vector.broadcast %41 : vector<8x1xf32> to vector<8x546xf32>
    %44 = arith.mulf %43, %42 : vector<8x546xf32>
    %45 = arith.addf %40, %44 : vector<8x546xf32>
    %46 = vector.extract_strided_slice %4 {offsets = [0, 8], sizes = [8, 1], strides = [1, 1]} : vector<8x9xf32> to vector<8x1xf32>
    %47 = vector.extract_strided_slice %3 {offsets = [0, 34], sizes = [8, 546], strides = [1, 1]} : vector<8x640xf32> to vector<8x546xf32>
    %48 = vector.broadcast %46 : vector<8x1xf32> to vector<8x546xf32>
    %49 = arith.mulf %48, %47 : vector<8x546xf32>
    %50 = arith.addf %45, %49 : vector<8x546xf32>
    %c0_4 = arith.constant 0 : index
    %c0_5 = arith.constant 0 : index
    %51 = vector.load %arg3[%c0_4, %c0_5] : memref<8x1xf32, #tpu.memory_space<vmem>>, vector<8x1xf32>
    %52 = vector.broadcast %51 : vector<8x1xf32> to vector<8x546xf32>
    %53 = arith.addf %50, %52 : vector<8x546xf32>
    %cst_6 = arith.constant 0.000000e+00 : f32
    %54 = vector.broadcast %cst_6 : f32 to vector<8x546xf32>
    %55 = arith.maximumf %53, %54 : vector<8x546xf32>
    %56 = vector.extract_strided_slice %55 {offsets = [0, 0], sizes = [8, 512], strides = [1, 1]} : vector<8x546xf32> to vector<8x512xf32>
    %c0_7 = arith.constant 0 : index
    %c0_8 = arith.constant 0 : index
    %57 = vector.load %arg7[%c0_7, %c0_8] : memref<72x512xf32, #tpu.memory_space<vmem>>, vector<8x512xf32>
    tpu.vector_store %arg7[%c0_7, %c0_8], %56 {strides = array<i32>} : memref<72x512xf32, #tpu.memory_space<vmem>>, vector<8x512xf32>,
    %58 = vector.extract_strided_slice %55 {offsets = [0, 1], sizes = [8, 512], strides = [1, 1]} : vector<8x546xf32> to vector<8x512xf32>
    %c8 = arith.constant 8 : index
    %c0_9 = arith.constant 0 : index
    %59 = vector.load %arg7[%c8, %c0_9] : memref<72x512xf32, #tpu.memory_space<vmem>>, vector<8x512xf32>
    tpu.vector_store %arg7[%c8, %c0_9], %58 {strides = array<i32>} : memref<72x512xf32, #tpu.memory_space<vmem>>, vector<8x512xf32>,
    %60 = vector.extract_strided_slice %55 {offsets = [0, 2], sizes = [8, 512], strides = [1, 1]} : vector<8x546xf32> to vector<8x512xf32>
    %c16 = arith.constant 16 : index
    %c0_10 = arith.constant 0 : index
    %61 = vector.load %arg7[%c16, %c0_10] : memref<72x512xf32, #tpu.memory_space<vmem>>, vector<8x512xf32>
    tpu.vector_store %arg7[%c16, %c0_10], %60 {strides = array<i32>} : memref<72x512xf32, #tpu.memory_space<vmem>>, vector<8x512xf32>,
    %62 = vector.extract_strided_slice %55 {offsets = [0, 16], sizes = [8, 512], strides = [1, 1]} : vector<8x546xf32> to vector<8x512xf32>
    %c24 = arith.constant 24 : index
    %c0_11 = arith.constant 0 : index
    %63 = vector.load %arg7[%c24, %c0_11] : memref<72x512xf32, #tpu.memory_space<vmem>>, vector<8x512xf32>
    tpu.vector_store %arg7[%c24, %c0_11], %62 {strides = array<i32>} : memref<72x512xf32, #tpu.memory_space<vmem>>, vector<8x512xf32>,
    %64 = vector.extract_strided_slice %55 {offsets = [0, 17], sizes = [8, 512], strides = [1, 1]} : vector<8x546xf32> to vector<8x512xf32>
    %c32 = arith.constant 32 : index
    %c0_12 = arith.constant 0 : index
    %65 = vector.load %arg7[%c32, %c0_12] : memref<72x512xf32, #tpu.memory_space<vmem>>, vector<8x512xf32>
    tpu.vector_store %arg7[%c32, %c0_12], %64 {strides = array<i32>} : memref<72x512xf32, #tpu.memory_space<vmem>>, vector<8x512xf32>,
    %66 = vector.extract_strided_slice %55 {offsets = [0, 18], sizes = [8, 512], strides = [1, 1]} : vector<8x546xf32> to vector<8x512xf32>
    %c40 = arith.constant 40 : index
    %c0_13 = arith.constant 0 : index
    %67 = vector.load %arg7[%c40, %c0_13] : memref<72x512xf32, #tpu.memory_space<vmem>>, vector<8x512xf32>
    tpu.vector_store %arg7[%c40, %c0_13], %66 {strides = array<i32>} : memref<72x512xf32, #tpu.memory_space<vmem>>, vector<8x512xf32>,
    %68 = vector.extract_strided_slice %55 {offsets = [0, 32], sizes = [8, 512], strides = [1, 1]} : vector<8x546xf32> to vector<8x512xf32>
    %c48 = arith.constant 48 : index
    %c0_14 = arith.constant 0 : index
    %69 = vector.load %arg7[%c48, %c0_14] : memref<72x512xf32, #tpu.memory_space<vmem>>, vector<8x512xf32>
    tpu.vector_store %arg7[%c48, %c0_14], %68 {strides = array<i32>} : memref<72x512xf32, #tpu.memory_space<vmem>>, vector<8x512xf32>,
    %70 = vector.extract_strided_slice %55 {offsets = [0, 33], sizes = [8, 512], strides = [1, 1]} : vector<8x546xf32> to vector<8x512xf32>
    %c56 = arith.constant 56 : index
    %c0_15 = arith.constant 0 : index
    %71 = vector.load %arg7[%c56, %c0_15] : memref<72x512xf32, #tpu.memory_space<vmem>>, vector<8x512xf32>
    tpu.vector_store %arg7[%c56, %c0_15], %70 {strides = array<i32>} : memref<72x512xf32, #tpu.memory_space<vmem>>, vector<8x512xf32>,
    %72 = vector.extract_strided_slice %55 {offsets = [0, 34], sizes = [8, 512], strides = [1, 1]} : vector<8x546xf32> to vector<8x512xf32>
    %c64 = arith.constant 64 : index
    %c0_16 = arith.constant 0 : index
    %73 = vector.load %arg7[%c64, %c0_16] : memref<72x512xf32, #tpu.memory_space<vmem>>, vector<8x512xf32>
    tpu.vector_store %arg7[%c64, %c0_16], %72 {strides = array<i32>} : memref<72x512xf32, #tpu.memory_space<vmem>>, vector<8x512xf32>,
    %c0_17 = arith.constant 0 : index
    %c0_18 = arith.constant 0 : index
    %74 = vector.load %arg7[%c0_17, %c0_18] : memref<72x512xf32, #tpu.memory_space<vmem>>, vector<72x512xf32>
    %75 = arith.truncf %74 : vector<72x512xf32> to vector<72x512xbf16>
    %c0_19 = arith.constant 0 : index
    %c0_20 = arith.constant 0 : index
    %76 = vector.load %arg4[%c0_19, %c0_20] : memref<64x72xbf16, #tpu.memory_space<vmem>>, vector<64x72xbf16>
    %cst_21 = arith.constant dense<0.000000e+00> : vector<64x512xf32>
    %77 = tpu.matmul %76, %75, %cst_21 {dimension_numbers = #tpu.dot_dimension_numbers<[1], [0], [0], [1], [0, 0, 1, 1], [], []>} : vector<64x72xbf16>, vector<72x512xbf16>, vector<64x512xf32> -> vector<64x512xf32>
    %c0_22 = arith.constant 0 : index
    %c0_23 = arith.constant 0 : index
    %78 = vector.load %arg5[%c0_22, %c0_23] : memref<64x1xf32, #tpu.memory_space<vmem>>, vector<64x1xf32>
    %79 = vector.broadcast %78 : vector<64x1xf32> to vector<64x512xf32>
    %80 = arith.addf %77, %79 : vector<64x512xf32>
    %cst_24 = arith.constant 0.000000e+00 : f32
    %81 = vector.broadcast %cst_24 : f32 to vector<64x512xf32>
    %82 = arith.maximumf %80, %81 : vector<64x512xf32>
    %83 = arith.truncf %82 : vector<64x512xf32> to vector<64x512xbf16>
    %84 = vector.extract_strided_slice %83 {offsets = [0, 0], sizes = [64, 256], strides = [1, 1]} : vector<64x512xbf16> to vector<64x256xbf16>
    %c0_25 = arith.constant 0 : index
    %c0_26 = arith.constant 0 : index
    %c0_27 = arith.constant 0 : index
    %c0_28 = arith.constant 0 : index
    %85 = vector.load %arg6[%c0_25, %c0_26, %c0_27, %c0_28] : memref<1x2x64x256xbf16, #tpu.memory_space<vmem>>, vector<1x1x64x256xbf16>
    %86 = vector.shape_cast %85 : vector<1x1x64x256xbf16> to vector<64x256xbf16>
    %87 = vector.shape_cast %84 : vector<64x256xbf16> to vector<1x1x64x256xbf16>
    tpu.vector_store %arg6[%c0_25, %c0_26, %c0_27, %c0_28], %87 {strides = array<i32>} : memref<1x2x64x256xbf16, #tpu.memory_space<vmem>>, vector<1x1x64x256xbf16>,
    %88 = vector.extract_strided_slice %83 {offsets = [0, 256], sizes = [64, 256], strides = [1, 1]} : vector<64x512xbf16> to vector<64x256xbf16>
    %c0_29 = arith.constant 0 : index
    %c1 = arith.constant 1 : index
    %c0_30 = arith.constant 0 : index
    %c0_31 = arith.constant 0 : index
    %89 = vector.load %arg6[%c0_29, %c1, %c0_30, %c0_31] : memref<1x2x64x256xbf16, #tpu.memory_space<vmem>>, vector<1x1x64x256xbf16>
    %90 = vector.shape_cast %89 : vector<1x1x64x256xbf16> to vector<64x256xbf16>
    %91 = vector.shape_cast %88 : vector<64x256xbf16> to vector<1x1x64x256xbf16>
    tpu.vector_store %arg6[%c0_29, %c1, %c0_30, %c0_31], %91 {strides = array<i32>} : memref<1x2x64x256xbf16, #tpu.memory_space<vmem>>, vector<1x1x64x256xbf16>,
    return
  }
  func.func @transform_0(%arg0: i32) -> (i32, i32, i32) {
    %c0_i32 = arith.constant 0 : i32
    %c0_i32_0 = arith.constant 0 : i32
    %c0_i32_1 = arith.constant 0 : i32
    return %arg0, %c0_i32, %c0_i32_0 : i32, i32, i32
  }
  func.func @transform_1(%arg0: i32) -> (i32, i32) {
    %c0_i32 = arith.constant 0 : i32
    %c0_i32_0 = arith.constant 0 : i32
    %c0_i32_1 = arith.constant 0 : i32
    return %c0_i32, %c0_i32_0 : i32, i32
  }
  func.func @transform_2(%arg0: i32) -> (i32, i32) {
    %c0_i32 = arith.constant 0 : i32
    %c0_i32_0 = arith.constant 0 : i32
    %c0_i32_1 = arith.constant 0 : i32
    return %c0_i32, %c0_i32_0 : i32, i32
  }
  func.func @transform_3(%arg0: i32) -> (i32, i32) {
    %c0_i32 = arith.constant 0 : i32
    %c0_i32_0 = arith.constant 0 : i32
    %c0_i32_1 = arith.constant 0 : i32
    return %c0_i32, %c0_i32_0 : i32, i32
  }
  func.func @transform_4(%arg0: i32) -> (i32, i32) {
    %c0_i32 = arith.constant 0 : i32
    %c0_i32_0 = arith.constant 0 : i32
    %c0_i32_1 = arith.constant 0 : i32
    return %c0_i32, %c0_i32_0 : i32, i32
  }
  func.func @transform_5(%arg0: i32) -> (i32, i32, i32, i32) {
    %c0_i32 = arith.constant 0 : i32
    %c0_i32_0 = arith.constant 0 : i32
    %c0_i32_1 = arith.constant 0 : i32
    %c0_i32_2 = arith.constant 0 : i32
    return %arg0, %c0_i32, %c0_i32_0, %c0_i32_1 : i32, i32, i32, i32
  }
}

</mosaic_0001>

<llo_original>
// kernel: encoder_forward.1
$region0: #{encoder_forward.1}
  #allocation0 [shape = 'u32[]', space=smem, size = 0x4, offset = 0x4, fixed_abs, tag = 'smem constant byte address 0x4 - core index']
  #allocation1 [shape = 'u32[144,128]{1,0:T(1,128)}', space=vmem, size = 0x12000, scoped, tag = 'internal scratch']
  #allocation2 [shape = 'f32[72,512]{1,0:T(8,128)}', space=vmem, size = 0x24000, scoped, tag = 'scratch operand']
  %s0 = inlined_call_operand.vmem [shape: f32[1,1,640], index: 0, kind: input, shape index: {}]
  %s1 = inlined_call_operand.vmem [shape: f32[8,9], index: 1, kind: input, shape index: {}]
  %s2 = inlined_call_operand.vmem [shape: f32[8,1], index: 2, kind: input, shape index: {}]
  %s3 = inlined_call_operand.vmem [shape: bf16[64,72], index: 3, kind: input, shape index: {}]
  %s4 = inlined_call_operand.vmem [shape: f32[64,1], index: 4, kind: input, shape index: {}]
  %s5 = inlined_call_operand.vmem [shape: bf16[1,2,64,256], index: 5, kind: output, shape index: {}]
  %s6 = sld [smem:[#allocation0]]
  $region30: #{encoder_forward.1} parent=0
    _
  %s8 = ssub.s32 1, %s6
  %s9 = scalar_select 0, %s8, %s6
  // Predicated region
  $region2: #{encoder_forward.1} parent=0 // pred_check
    _
  $region3: #{encoder_forward.1} parent=0 // pred_check_branch
    %11 = sbr.rel (0) target = $region5
  $region4: #{encoder_forward.1} parent=0 // pred_region
    _
  $region5: #{encoder_forward.1} parent=0 // pred_fallthru
    _
  // Predicated region
  $region6: #{encoder_forward.1} parent=0 // pred_check
    _
  $region7: #{encoder_forward.1} parent=0 // pred_check_branch
    %13 = sbr.rel (0) target = $region9
  $region8: #{encoder_forward.1} parent=0 // pred_region
    _
  $region9: #{encoder_forward.1} parent=0 // pred_fallthru
    _
  // Predicated region
  $region10: #{encoder_forward.1} parent=0 // pred_check
    _
  $region11: #{encoder_forward.1} parent=0 // pred_check_branch
    %15 = sbr.rel (0) target = $region13
  $region12: #{encoder_forward.1} parent=0 // pred_region
    _
  $region13: #{encoder_forward.1} parent=0 // pred_fallthru
    _
  // Predicated region
  $region14: #{encoder_forward.1} parent=0 // pred_check
    _
  $region15: #{encoder_forward.1} parent=0 // pred_check_branch
    %17 = sbr.rel (0) target = $region17
  $region16: #{encoder_forward.1} parent=0 // pred_region
    _
  $region17: #{encoder_forward.1} parent=0 // pred_fallthru
    _
  // Predicated region
  $region18: #{encoder_forward.1} parent=0 // pred_check
    _
  $region19: #{encoder_forward.1} parent=0 // pred_check_branch
    %19 = sbr.rel (0) target = $region21
  $region20: #{encoder_forward.1} parent=0 // pred_region
    _
  $region21: #{encoder_forward.1} parent=0 // pred_fallthru
    _
  %v21 = vld [vmem:[%s0] sm:$0x1f]
  %v22 = vld [vmem:[%s1] sm:$0xff]
  %v24 = vlaneseq
  %v25 = vshrl.u32 %v24, 7
  %v26 = vsub.s32 0, %v25
  %v27 = vrot.slane %v21, %v26
  %v28 = vlaneseq
  %v29 = vshrl.u32 %v28, 7
  %v30 = vsub.s32 1, %v29
  %v31 = vrot.slane %v21, %v30
  %v32 = vlaneseq
  %v33 = vshrl.u32 %v32, 7
  %v34 = vsub.s32 2, %v33
  %v35 = vrot.slane %v21, %v34
  %v36 = vlaneseq
  %v37 = vshrl.u32 %v36, 7
  %v38 = vsub.s32 3, %v37
  %v39 = vrot.slane %v21, %v38
  %v40 = vlaneseq
  %v41 = vshrl.u32 %v40, 7
  %v42 = vsub.s32 4, %v41
  %v43 = vrot.slane %v21, %v42
  %50 = vset.pattern.permute.xlu0 0
  %51 = vperm.xlu0 %50, %v22
  %v52 = vpop.permute.xlu0 %51
  %v54 = vmul.f32 %v52, %v27
  %v55 = vmul.f32 %v52, %v31
  %v56 = vmul.f32 %v52, %v35
  %v57 = vmul.f32 %v52, %v39
  %v58 = vmul.f32 %v52, %v43
  %v59 = vadd.f32 %v54, 0.0
  %v60 = vadd.f32 %v55, 0.0
  %v61 = vadd.f32 %v56, 0.0
  %v62 = vadd.f32 %v57, 0.0
  %v63 = vadd.f32 %v58, 0.0
  %64 = vset.pattern.permute.xlu0 1
  %65 = vperm.xlu0 %64, %v22
  %v66 = vpop.permute.xlu0 %65
  %v68 = vmul.f32 %v66, %v27
  %v69 = vmul.f32 %v66, %v31
  %v70 = vmul.f32 %v66, %v35
  %v71 = vmul.f32 %v66, %v39
  %v72 = vmul.f32 %v66, %v43
  %78 = vrot.lane.b32.xlu0 %v68, 127
  %v79 = vpop.permute.xlu0 %78
  %80 = vrot.lane.b32.xlu0 %v69, 127
  %v81 = vpop.permute.xlu0 %80
  %82 = vrot.lane.b32.xlu0 %v70, 127
  %v83 = vpop.permute.xlu0 %82
  %84 = vrot.lane.b32.xlu0 %v71, 127
  %v85 = vpop.permute.xlu0 %84
  %86 = vrot.lane.b32.xlu0 %v72, 127
  %v87 = vpop.permute.xlu0 %86
  %vm88 = vcmask 1039360
  %v89 = vsel %vm88, %v79, %v81
  %v90 = vsel %vm88, %v81, %v83
  %v91 = vsel %vm88, %v83, %v85
  %v92 = vsel %vm88, %v85, %v87
  %v98 = vadd.f32 %v59, %v89
  %v99 = vadd.f32 %v60, %v90
  %v100 = vadd.f32 %v61, %v91
  %v101 = vadd.f32 %v62, %v92
  %v102 = vadd.f32 %v63, %v87
  %103 = vset.pattern.permute.xlu0 2
  %104 = vperm.xlu0 %103, %v22
  %v105 = vpop.permute.xlu0 %104
  %v107 = vmul.f32 %v105, %v27
  %v108 = vmul.f32 %v105, %v31
  %v109 = vmul.f32 %v105, %v35
  %v110 = vmul.f32 %v105, %v39
  %v111 = vmul.f32 %v105, %v43
  %117 = vrot.lane.b32.xlu0 %v107, 126
  %v118 = vpop.permute.xlu0 %117
  %119 = vrot.lane.b32.xlu0 %v108, 126
  %v120 = vpop.permute.xlu0 %119
  %121 = vrot.lane.b32.xlu0 %v109, 126
  %v122 = vpop.permute.xlu0 %121
  %123 = vrot.lane.b32.xlu0 %v110, 126
  %v124 = vpop.permute.xlu0 %123
  %125 = vrot.lane.b32.xlu0 %v111, 126
  %v126 = vpop.permute.xlu0 %125
  %vm127 = vcmask 1031168
  %v128 = vsel %vm127, %v118, %v120
  %v129 = vsel %vm127, %v120, %v122
  %v130 = vsel %vm127, %v122, %v124
  %v131 = vsel %vm127, %v124, %v126
  %v137 = vadd.f32 %v98, %v128
  %v138 = vadd.f32 %v99, %v129
  %v139 = vadd.f32 %v100, %v130
  %v140 = vadd.f32 %v101, %v131
  %v141 = vadd.f32 %v102, %v126
  %142 = vset.pattern.permute.xlu0 3
  %143 = vperm.xlu0 %142, %v22
  %v144 = vpop.permute.xlu0 %143
  %v146 = vmul.f32 %v144, %v27
  %v147 = vmul.f32 %v144, %v31
  %v148 = vmul.f32 %v144, %v35
  %v149 = vmul.f32 %v144, %v39
  %v150 = vmul.f32 %v144, %v43
  %156 = vrot.lane.b32.xlu0 %v146, 112
  %v157 = vpop.permute.xlu0 %156
  %158 = vrot.lane.b32.xlu0 %v147, 112
  %v159 = vpop.permute.xlu0 %158
  %160 = vrot.lane.b32.xlu0 %v148, 112
  %v161 = vpop.permute.xlu0 %160
  %162 = vrot.lane.b32.xlu0 %v149, 112
  %v163 = vpop.permute.xlu0 %162
  %164 = vrot.lane.b32.xlu0 %v150, 112
  %v165 = vpop.permute.xlu0 %164
  %vm166 = vcmask 916480
  %v167 = vsel %vm166, %v157, %v159
  %v168 = vsel %vm166, %v159, %v161
  %v169 = vsel %vm166, %v161, %v163
  %v170 = vsel %vm166, %v163, %v165
  %v176 = vadd.f32 %v137, %v167
  %v177 = vadd.f32 %v138, %v168
  %v178 = vadd.f32 %v139, %v169
  %v179 = vadd.f32 %v140, %v170
  %v180 = vadd.f32 %v141, %v165
  %181 = vset.pattern.permute.xlu0 4
  %182 = vperm.xlu0 %181, %v22
  %v183 = vpop.permute.xlu0 %182
  %v185 = vmul.f32 %v183, %v27
  %v186 = vmul.f32 %v183, %v31
  %v187 = vmul.f32 %v183, %v35
  %v188 = vmul.f32 %v183, %v39
  %v189 = vmul.f32 %v183, %v43
  %195 = vrot.lane.b32.xlu0 %v185, 111
  %v196 = vpop.permute.xlu0 %195
  %197 = vrot.lane.b32.xlu0 %v186, 111
  %v198 = vpop.permute.xlu0 %197
  %199 = vrot.lane.b32.xlu0 %v187, 111
  %v200 = vpop.permute.xlu0 %199
  %201 = vrot.lane.b32.xlu0 %v188, 111
  %v202 = vpop.permute.xlu0 %201
  %203 = vrot.lane.b32.xlu0 %v189, 111
  %v204 = vpop.permute.xlu0 %203
  %vm205 = vcmask 908288
  %v206 = vsel %vm205, %v196, %v198
  %v207 = vsel %vm205, %v198, %v200
  %v208 = vsel %vm205, %v200, %v202
  %v209 = vsel %vm205, %v202, %v204
  %v215 = vadd.f32 %v176, %v206
  %v216 = vadd.f32 %v177, %v207
  %v217 = vadd.f32 %v178, %v208
  %v218 = vadd.f32 %v179, %v209
  %v219 = vadd.f32 %v180, %v204
  %220 = vset.pattern.permute.xlu0 5
  %221 = vperm.xlu0 %220, %v22
  %v222 = vpop.permute.xlu0 %221
  %v224 = vmul.f32 %v222, %v27
  %v225 = vmul.f32 %v222, %v31
  %v226 = vmul.f32 %v222, %v35
  %v227 = vmul.f32 %v222, %v39
  %v228 = vmul.f32 %v222, %v43
  %234 = vrot.lane.b32.xlu0 %v224, 110
  %v235 = vpop.permute.xlu0 %234
  %236 = vrot.lane.b32.xlu0 %v225, 110
  %v237 = vpop.permute.xlu0 %236
  %238 = vrot.lane.b32.xlu0 %v226, 110
  %v239 = vpop.permute.xlu0 %238
  %240 = vrot.lane.b32.xlu0 %v227, 110
  %v241 = vpop.permute.xlu0 %240
  %242 = vrot.lane.b32.xlu0 %v228, 110
  %v243 = vpop.permute.xlu0 %242
  %vm244 = vcmask 900096
  %v245 = vsel %vm244, %v235, %v237
  %v246 = vsel %vm244, %v237, %v239
  %v247 = vsel %vm244, %v239, %v241
  %v248 = vsel %vm244, %v241, %v243
  %v254 = vadd.f32 %v215, %v245
  %v255 = vadd.f32 %v216, %v246
  %v256 = vadd.f32 %v217, %v247
  %v257 = vadd.f32 %v218, %v248
  %v258 = vadd.f32 %v219, %v243
  %259 = vset.pattern.permute.xlu0 6
  %260 = vperm.xlu0 %259, %v22
  %v261 = vpop.permute.xlu0 %260
  %v263 = vmul.f32 %v261, %v27
  %v264 = vmul.f32 %v261, %v31
  %v265 = vmul.f32 %v261, %v35
  %v266 = vmul.f32 %v261, %v39
  %v267 = vmul.f32 %v261, %v43
  %273 = vrot.lane.b32.xlu0 %v263, 96
  %v274 = vpop.permute.xlu0 %273
  %275 = vrot.lane.b32.xlu0 %v264, 96
  %v276 = vpop.permute.xlu0 %275
  %277 = vrot.lane.b32.xlu0 %v265, 96
  %v278 = vpop.permute.xlu0 %277
  %279 = vrot.lane.b32.xlu0 %v266, 96
  %v280 = vpop.permute.xlu0 %279
  %281 = vrot.lane.b32.xlu0 %v267, 96
  %v282 = vpop.permute.xlu0 %281
  %vm283 = vcmask 785408
  %v284 = vsel %vm283, %v274, %v276
  %v285 = vsel %vm283, %v276, %v278
  %v286 = vsel %vm283, %v278, %v280
  %v287 = vsel %vm283, %v280, %v282
  %v293 = vadd.f32 %v254, %v284
  %v294 = vadd.f32 %v255, %v285
  %v295 = vadd.f32 %v256, %v286
  %v296 = vadd.f32 %v257, %v287
  %v297 = vadd.f32 %v258, %v282
  %298 = vset.pattern.permute.xlu0 7
  %299 = vperm.xlu0 %298, %v22
  %v300 = vpop.permute.xlu0 %299
  %v302 = vmul.f32 %v300, %v27
  %v303 = vmul.f32 %v300, %v31
  %v304 = vmul.f32 %v300, %v35
  %v305 = vmul.f32 %v300, %v39
  %v306 = vmul.f32 %v300, %v43
  %312 = vrot.lane.b32.xlu0 %v302, 95
  %v313 = vpop.permute.xlu0 %312
  %314 = vrot.lane.b32.xlu0 %v303, 95
  %v315 = vpop.permute.xlu0 %314
  %316 = vrot.lane.b32.xlu0 %v304, 95
  %v317 = vpop.permute.xlu0 %316
  %318 = vrot.lane.b32.xlu0 %v305, 95
  %v319 = vpop.permute.xlu0 %318
  %320 = vrot.lane.b32.xlu0 %v306, 95
  %v321 = vpop.permute.xlu0 %320
  %vm322 = vcmask 777216
  %v323 = vsel %vm322, %v313, %v315
  %v324 = vsel %vm322, %v315, %v317
  %v325 = vsel %vm322, %v317, %v319
  %v326 = vsel %vm322, %v319, %v321
  %v332 = vadd.f32 %v293, %v323
  %v333 = vadd.f32 %v294, %v324
  %v334 = vadd.f32 %v295, %v325
  %v335 = vadd.f32 %v296, %v326
  %v336 = vadd.f32 %v297, %v321
  %337 = vset.pattern.permute.xlu0 8
  %338 = vperm.xlu0 %337, %v22
  %v339 = vpop.permute.xlu0 %338
  %v341 = vmul.f32 %v339, %v27
  %v342 = vmul.f32 %v339, %v31
  %v343 = vmul.f32 %v339, %v35
  %v344 = vmul.f32 %v339, %v39
  %v345 = vmul.f32 %v339, %v43
  %351 = vrot.lane.b32.xlu0 %v341, 94
  %v352 = vpop.permute.xlu0 %351
  %353 = vrot.lane.b32.xlu0 %v342, 94
  %v354 = vpop.permute.xlu0 %353
  %355 = vrot.lane.b32.xlu0 %v343, 94
  %v356 = vpop.permute.xlu0 %355
  %357 = vrot.lane.b32.xlu0 %v344, 94
  %v358 = vpop.permute.xlu0 %357
  %359 = vrot.lane.b32.xlu0 %v345, 94
  %v360 = vpop.permute.xlu0 %359
  %vm361 = vcmask 769024
  %v362 = vsel %vm361, %v352, %v354
  %v363 = vsel %vm361, %v354, %v356
  %v364 = vsel %vm361, %v356, %v358
  %v365 = vsel %vm361, %v358, %v360
  %v371 = vadd.f32 %v332, %v362
  %v372 = vadd.f32 %v333, %v363
  %v373 = vadd.f32 %v334, %v364
  %v374 = vadd.f32 %v335, %v365
  %v375 = vadd.f32 %v336, %v360
  %v376 = vld [vmem:[%s2] sm:$0xff]
  %378 = vset.pattern.permute.xlu0 0
  %379 = vperm.xlu0 %378, %v376
  %v380 = vpop.permute.xlu0 %379
  %v382 = vadd.f32 %v371, %v380
  %v383 = vadd.f32 %v372, %v380
  %v384 = vadd.f32 %v373, %v380
  %v385 = vadd.f32 %v374, %v380
  %v386 = vadd.f32 %v375, %v380
  %v387 = vmax.f32 %v382, 0.0
  %v388 = vmax.f32 %v383, 0.0
  %v389 = vmax.f32 %v384, 0.0
  %v390 = vmax.f32 %v385, 0.0
  %v391 = vmax.f32 %v386, 0.0
  %392 = vst [vmem:[#allocation2] sm:$0xff] %v387
  %393 = vst [vmem:[#allocation2 + $0x8] sm:$0xff] %v388
  %394 = vst [vmem:[#allocation2 + $0x10] sm:$0xff] %v389
  %395 = vst [vmem:[#allocation2 + $0x18] sm:$0xff] %v390
  %401 = vrot.lane.b32.xlu0 %v387, 127
  %v402 = vpop.permute.xlu0 %401
  %403 = vrot.lane.b32.xlu0 %v388, 127
  %v404 = vpop.permute.xlu0 %403
  %405 = vrot.lane.b32.xlu0 %v389, 127
  %v406 = vpop.permute.xlu0 %405
  %407 = vrot.lane.b32.xlu0 %v390, 127
  %v408 = vpop.permute.xlu0 %407
  %409 = vrot.lane.b32.xlu0 %v391, 127
  %v410 = vpop.permute.xlu0 %409
  %v411 = vsel %vm88, %v402, %v404
  %v412 = vsel %vm88, %v404, %v406
  %v413 = vsel %vm88, %v406, %v408
  %v414 = vsel %vm88, %v408, %v410
  %419 = vst [vmem:[#allocation2 + $0x20] sm:$0xff] %v411
  %420 = vst [vmem:[#allocation2 + $0x28] sm:$0xff] %v412
  %421 = vst [vmem:[#allocation2 + $0x30] sm:$0xff] %v413
  %422 = vst [vmem:[#allocation2 + $0x38] sm:$0xff] %v414
  %423 = vrot.lane.b32.xlu0 %v387, 126
  %v424 = vpop.permute.xlu0 %423
  %425 = vrot.lane.b32.xlu0 %v388, 126
  %v426 = vpop.permute.xlu0 %425
  %427 = vrot.lane.b32.xlu0 %v389, 126
  %v428 = vpop.permute.xlu0 %427
  %429 = vrot.lane.b32.xlu0 %v390, 126
  %v430 = vpop.permute.xlu0 %429
  %431 = vrot.lane.b32.xlu0 %v391, 126
  %v432 = vpop.permute.xlu0 %431
  %v433 = vsel %vm127, %v424, %v426
  %v434 = vsel %vm127, %v426, %v428
  %v435 = vsel %vm127, %v428, %v430
  %v436 = vsel %vm127, %v430, %v432
  %441 = vst [vmem:[#allocation2 + $0x40] sm:$0xff] %v433
  %442 = vst [vmem:[#allocation2 + $0x48] sm:$0xff] %v434
  %443 = vst [vmem:[#allocation2 + $0x50] sm:$0xff] %v435
  %444 = vst [vmem:[#allocation2 + $0x58] sm:$0xff] %v436
  %445 = vrot.lane.b32.xlu0 %v387, 112
  %v446 = vpop.permute.xlu0 %445
  %447 = vrot.lane.b32.xlu0 %v388, 112
  %v448 = vpop.permute.xlu0 %447
  %449 = vrot.lane.b32.xlu0 %v389, 112
  %v450 = vpop.permute.xlu0 %449
  %451 = vrot.lane.b32.xlu0 %v390, 112
  %v452 = vpop.permute.xlu0 %451
  %453 = vrot.lane.b32.xlu0 %v391, 112
  %v454 = vpop.permute.xlu0 %453
  %v455 = vsel %vm166, %v446, %v448
  %v456 = vsel %vm166, %v448, %v450
  %v457 = vsel %vm166, %v450, %v452
  %v458 = vsel %vm166, %v452, %v454
  %463 = vst [vmem:[#allocation2 + $0x60] sm:$0xff] %v455
  %464 = vst [vmem:[#allocation2 + $0x68] sm:$0xff] %v456
  %465 = vst [vmem:[#allocation2 + $0x70] sm:$0xff] %v457
  %466 = vst [vmem:[#allocation2 + $0x78] sm:$0xff] %v458
  %467 = vrot.lane.b32.xlu0 %v387, 111
  %v468 = vpop.permute.xlu0 %467
  %469 = vrot.lane.b32.xlu0 %v388, 111
  %v470 = vpop.permute.xlu0 %469
  %471 = vrot.lane.b32.xlu0 %v389, 111
  %v472 = vpop.permute.xlu0 %471
  %473 = vrot.lane.b32.xlu0 %v390, 111
  %v474 = vpop.permute.xlu0 %473
  %475 = vrot.lane.b32.xlu0 %v391, 111
  %v476 = vpop.permute.xlu0 %475
  %v477 = vsel %vm205, %v468, %v470
  %v478 = vsel %vm205, %v470, %v472
  %v479 = vsel %vm205, %v472, %v474
  %v480 = vsel %vm205, %v474, %v476
  %485 = vst [vmem:[#allocation2 + $0x80] sm:$0xff] %v477
  %486 = vst [vmem:[#allocation2 + $0x88] sm:$0xff] %v478
  %487 = vst [vmem:[#allocation2 + $0x90] sm:$0xff] %v479
  %488 = vst [vmem:[#allocation2 + $0x98] sm:$0xff] %v480
  %489 = vrot.lane.b32.xlu0 %v387, 110
  %v490 = vpop.permute.xlu0 %489
  %491 = vrot.lane.b32.xlu0 %v388, 110
  %v492 = vpop.permute.xlu0 %491
  %493 = vrot.lane.b32.xlu0 %v389, 110
  %v494 = vpop.permute.xlu0 %493
  %495 = vrot.lane.b32.xlu0 %v390, 110
  %v496 = vpop.permute.xlu0 %495
  %497 = vrot.lane.b32.xlu0 %v391, 110
  %v498 = vpop.permute.xlu0 %497
  %v499 = vsel %vm244, %v490, %v492
  %v500 = vsel %vm244, %v492, %v494
  %v501 = vsel %vm244, %v494, %v496
  %v502 = vsel %vm244, %v496, %v498
  %507 = vst [vmem:[#allocation2 + $0xa0] sm:$0xff] %v499
  %508 = vst [vmem:[#allocation2 + $0xa8] sm:$0xff] %v500
  %509 = vst [vmem:[#allocation2 + $0xb0] sm:$0xff] %v501
  %510 = vst [vmem:[#allocation2 + $0xb8] sm:$0xff] %v502
  %511 = vrot.lane.b32.xlu0 %v387, 96
  %v512 = vpop.permute.xlu0 %511
  %513 = vrot.lane.b32.xlu0 %v388, 96
  %v514 = vpop.permute.xlu0 %513
  %515 = vrot.lane.b32.xlu0 %v389, 96
  %v516 = vpop.permute.xlu0 %515
  %517 = vrot.lane.b32.xlu0 %v390, 96
  %v518 = vpop.permute.xlu0 %517
  %519 = vrot.lane.b32.xlu0 %v391, 96
  %v520 = vpop.permute.xlu0 %519
  %v521 = vsel %vm283, %v512, %v514
  %v522 = vsel %vm283, %v514, %v516
  %v523 = vsel %vm283, %v516, %v518
  %v524 = vsel %vm283, %v518, %v520
  %529 = vst [vmem:[#allocation2 + $0xc0] sm:$0xff] %v521
  %530 = vst [vmem:[#allocation2 + $0xc8] sm:$0xff] %v522
  %531 = vst [vmem:[#allocation2 + $0xd0] sm:$0xff] %v523
  %532 = vst [vmem:[#allocation2 + $0xd8] sm:$0xff] %v524
  %533 = vrot.lane.b32.xlu0 %v387, 95
  %v534 = vpop.permute.xlu0 %533
  %535 = vrot.lane.b32.xlu0 %v388, 95
  %v536 = vpop.permute.xlu0 %535
  %537 = vrot.lane.b32.xlu0 %v389, 95
  %v538 = vpop.permute.xlu0 %537
  %539 = vrot.lane.b32.xlu0 %v390, 95
  %v540 = vpop.permute.xlu0 %539
  %541 = vrot.lane.b32.xlu0 %v391, 95
  %v542 = vpop.permute.xlu0 %541
  %v543 = vsel %vm322, %v534, %v536
  %v544 = vsel %vm322, %v536, %v538
  %v545 = vsel %vm322, %v538, %v540
  %v546 = vsel %vm322, %v540, %v542
  %551 = vst [vmem:[#allocation2 + $0xe0] sm:$0xff] %v543
  %552 = vst [vmem:[#allocation2 + $0xe8] sm:$0xff] %v544
  %553 = vst [vmem:[#allocation2 + $0xf0] sm:$0xff] %v545
  %554 = vst [vmem:[#allocation2 + $0xf8] sm:$0xff] %v546
  %555 = vrot.lane.b32.xlu0 %v387, 94
  %v556 = vpop.permute.xlu0 %555
  %557 = vrot.lane.b32.xlu0 %v388, 94
  %v558 = vpop.permute.xlu0 %557
  %559 = vrot.lane.b32.xlu0 %v389, 94
  %v560 = vpop.permute.xlu0 %559
  %561 = vrot.lane.b32.xlu0 %v390, 94
  %v562 = vpop.permute.xlu0 %561
  %563 = vrot.lane.b32.xlu0 %v391, 94
  %v564 = vpop.permute.xlu0 %563
  %v565 = vsel %vm361, %v556, %v558
  %v566 = vsel %vm361, %v558, %v560
  %v567 = vsel %vm361, %v560, %v562
  %v568 = vsel %vm361, %v562, %v564
  %573 = vst [vmem:[#allocation2 + $0x100] sm:$0xff] %v565
  %574 = vst [vmem:[#allocation2 + $0x108] sm:$0xff] %v566
  %575 = vst [vmem:[#allocation2 + $0x110] sm:$0xff] %v567
  %576 = vst [vmem:[#allocation2 + $0x118] sm:$0xff] %v568
  %v577 = vld [vmem:[#allocation2] sm:$0xff]
  %v578 = vld [vmem:[#allocation2 + $0x8] sm:$0xff]
  %v579 = vld [vmem:[#allocation2 + $0x10] sm:$0xff]
  %v580 = vld [vmem:[#allocation2 + $0x18] sm:$0xff]
  %v581 = vld [vmem:[#allocation2 + $0x20] sm:$0xff]
  %v582 = vld [vmem:[#allocation2 + $0x28] sm:$0xff]
  %v583 = vld [vmem:[#allocation2 + $0x30] sm:$0xff]
  %v584 = vld [vmem:[#allocation2 + $0x38] sm:$0xff]
  %v585 = vld [vmem:[#allocation2 + $0x40] sm:$0xff]
  %v586 = vld [vmem:[#allocation2 + $0x48] sm:$0xff]
  %v587 = vld [vmem:[#allocation2 + $0x50] sm:$0xff]
  %v588 = vld [vmem:[#allocation2 + $0x58] sm:$0xff]
  %v589 = vld [vmem:[#allocation2 + $0x60] sm:$0xff]
  %v590 = vld [vmem:[#allocation2 + $0x68] sm:$0xff]
  %v591 = vld [vmem:[#allocation2 + $0x70] sm:$0xff]
  %v592 = vld [vmem:[#allocation2 + $0x78] sm:$0xff]
  %v593 = vld [vmem:[#allocation2 + $0x80] sm:$0xff]
  %v594 = vld [vmem:[#allocation2 + $0x88] sm:$0xff]
  %v595 = vld [vmem:[#allocation2 + $0x90] sm:$0xff]
  %v596 = vld [vmem:[#allocation2 + $0x98] sm:$0xff]
  %v597 = vld [vmem:[#allocation2 + $0xa0] sm:$0xff]
  %v598 = vld [vmem:[#allocation2 + $0xa8] sm:$0xff]
  %v599 = vld [vmem:[#allocation2 + $0xb0] sm:$0xff]
  %v600 = vld [vmem:[#allocation2 + $0xb8] sm:$0xff]
  %v601 = vld [vmem:[#allocation2 + $0xc0] sm:$0xff]
  %v602 = vld [vmem:[#allocation2 + $0xc8] sm:$0xff]
  %v603 = vld [vmem:[#allocation2 + $0xd0] sm:$0xff]
  %v604 = vld [vmem:[#allocation2 + $0xd8] sm:$0xff]
  %v605 = vld [vmem:[#allocation2 + $0xe0] sm:$0xff]
  %v606 = vld [vmem:[#allocation2 + $0xe8] sm:$0xff]
  %v607 = vld [vmem:[#allocation2 + $0xf0] sm:$0xff]
  %v608 = vld [vmem:[#allocation2 + $0xf8] sm:$0xff]
  %v609 = vld [vmem:[#allocation2 + $0x100] sm:$0xff]
  %v610 = vld [vmem:[#allocation2 + $0x108] sm:$0xff]
  %v611 = vld [vmem:[#allocation2 + $0x110] sm:$0xff]
  %v612 = vld [vmem:[#allocation2 + $0x118] sm:$0xff]
  %v613 = vpack.c.bf16 %v581, %v577
  %v614 = vpack.c.bf16 %v582, %v578
  %v615 = vpack.c.bf16 %v583, %v579
  %v616 = vpack.c.bf16 %v584, %v580
  %v617 = vpack.c.bf16 %v589, %v585
  %v618 = vpack.c.bf16 %v590, %v586
  %v619 = vpack.c.bf16 %v591, %v587
  %v620 = vpack.c.bf16 %v592, %v588
  %v621 = vpack.c.bf16 %v597, %v593
  %v622 = vpack.c.bf16 %v598, %v594
  %v623 = vpack.c.bf16 %v599, %v595
  %v624 = vpack.c.bf16 %v600, %v596
  %v625 = vpack.c.bf16 %v605, %v601
  %v626 = vpack.c.bf16 %v606, %v602
  %v627 = vpack.c.bf16 %v607, %v603
  %v628 = vpack.c.bf16 %v608, %v604
  %v629 = vpack.c.bf16 %v609, %v609
  %v630 = vpack.c.bf16 %v610, %v610
  %v631 = vpack.c.bf16 %v611, %v611
  %v632 = vpack.c.bf16 %v612, %v612
  %v633 = vld [vmem:[%s3] sm:$0xf]
  %v634 = vld [vmem:[%s3 + $0x4] sm:$0xf]
  %v635 = vld [vmem:[%s3 + $0x8] sm:$0xf]
  %v636 = vld [vmem:[%s3 + $0xc] sm:$0xf]
  %v637 = vld [vmem:[%s3 + $0x10] sm:$0xf]
  %v638 = vld [vmem:[%s3 + $0x14] sm:$0xf]
  %v639 = vld [vmem:[%s3 + $0x18] sm:$0xf]
  %v640 = vld [vmem:[%s3 + $0x1c] sm:$0xf]
  %v641 = vld [vmem:[%s4] sm:$0xff]
  %v642 = vld [vmem:[%s4 + $0x8] sm:$0xff]
  %v643 = vld [vmem:[%s4 + $0x10] sm:$0xff]
  %v644 = vld [vmem:[%s4 + $0x18] sm:$0xff]
  %v645 = vld [vmem:[%s4 + $0x20] sm:$0xff]
  %v646 = vld [vmem:[%s4 + $0x28] sm:$0xff]
  %v647 = vld [vmem:[%s4 + $0x30] sm:$0xff]
  %v648 = vld [vmem:[%s4 + $0x38] sm:$0xff]
  %650 = vset.pattern.permute.xlu0 0
  %651 = vperm.xlu0 %650, %v641
  %v652 = vpop.permute.xlu0 %651
  %655 = vset.pattern.permute.xlu0 0
  %656 = vperm.xlu0 %655, %v642
  %v657 = vpop.permute.xlu0 %656
  %660 = vset.pattern.permute.xlu0 0
  %661 = vperm.xlu0 %660, %v643
  %v662 = vpop.permute.xlu0 %661
  %665 = vset.pattern.permute.xlu0 0
  %666 = vperm.xlu0 %665, %v644
  %v667 = vpop.permute.xlu0 %666
  %670 = vset.pattern.permute.xlu0 0
  %671 = vperm.xlu0 %670, %v645
  %v672 = vpop.permute.xlu0 %671
  %675 = vset.pattern.permute.xlu0 0
  %676 = vperm.xlu0 %675, %v646
  %v677 = vpop.permute.xlu0 %676
  %680 = vset.pattern.permute.xlu0 0
  %681 = vperm.xlu0 %680, %v647
  %v682 = vpop.permute.xlu0 %681
  %685 = vset.pattern.permute.xlu0 0
  %686 = vperm.xlu0 %685, %v648
  %v687 = vpop.permute.xlu0 %686
  %v697 = vunpack.c.l.b16 %v633
  %v698 = vunpack.c.l.b16 %v634
  %v699 = vunpack.c.l.b16 %v635
  %v700 = vunpack.c.l.b16 %v636
  %v701 = vunpack.c.l.b16 %v637
  %v702 = vunpack.c.l.b16 %v638
  %v703 = vunpack.c.l.b16 %v639
  %v704 = vunpack.c.l.b16 %v640
  %v705 = vpack.c.b16 %v698, %v697
  %v706 = vpack.c.b16 %v700, %v699
  %v707 = vpack.c.b16 %v702, %v701
  %v708 = vpack.c.b16 %v704, %v703
  %vm709 = vcmask 588800
  %v711 = vsel %vm709, %v705, 0
  %v714 = vsel %vm709, %v706, 0
  %v717 = vsel %vm709, %v707, 0
  %v720 = vsel %vm709, %v708, 0
  %vm722 = vcmask 1043456
  %v724 = vsel %vm722, %v629, 0
  %v727 = vsel %vm722, %v630, 0
  %v730 = vsel %vm722, %v631, 0
  %v733 = vsel %vm722, %v632, 0
  %735 = vmatprep.subr.bf16.mxu0 %v614
  %736 = vmatpush1.bf16.msra.mxu0 %v613
  %737 = vmatprep.subr.bf16.mxu0 %v618
  %738 = vmatpush1.bf16.msra.mxu0 %v617
  %739 = vmatprep.subr.bf16.mxu0 %v622
  %740 = vmatpush1.bf16.msra.mxu0 %v621
  %741 = vmatprep.subr.bf16.mxu0 %v626
  %742 = vmatpush1.bf16.msra.mxu0 %v625
  %743 = vmatprep.subr.bf16.mxu0 %v727
  %744 = vmatpush1.bf16.msra.mxu0 %v724
  %745 = vmatprep.subr.bf16.mxu0 0
  %746 = vmatpush1.bf16.msra.mxu0 0
  %747 = vmatprep.subr.bf16.mxu0 0
  %748 = vmatpush1.bf16.msra.mxu0 0
  %749 = vmatprep.subr.bf16.mxu0 0
  %750 = vmatpush1.bf16.msra.mxu0 0
  %751 = vmatprep.subr.bf16.mxu0 0
  %752 = vmatpush1.bf16.msra.mxu0 0
  %753 = vmatprep.subr.bf16.mxu0 0
  %754 = vmatpush1.bf16.msra.mxu0 0
  %755 = vmatprep.subr.bf16.mxu0 0
  %756 = vmatpush1.bf16.msra.mxu0 0
  %757 = vmatprep.subr.bf16.mxu0 0
  %758 = vmatpush1.bf16.msra.mxu0 0
  %759 = vmatprep.subr.bf16.mxu0 0
  %760 = vmatpush1.bf16.msra.mxu0 0
  %761 = vmatprep.subr.bf16.mxu0 0
  %762 = vmatpush1.bf16.msra.mxu0 0
  %763 = vmatprep.subr.bf16.mxu0 0
  %764 = vmatpush1.bf16.msra.mxu0 0
  %765 = vmatprep.subr.bf16.mxu0 0
  %766 = vmatpush1.bf16.msra.mxu0 0
  %767 = vmatprep.mubr.bf16.mxu0 0
  %768 = vmatmul.mubr.bf16.gmra.mrb[0].mxu0 %v711
  %v769 = vpop.f32.mrb[0].mxu0
  %v770 = vadd.f32 %v652, %v769
  %v771 = vpop.f32.mrb[0].mxu0
  %v772 = vadd.f32 %v652, %v771
  %v773 = vpop.f32.mrb[0].mxu0
  %v774 = vadd.f32 %v657, %v773
  %v775 = vpop.f32.mrb[0].mxu0
  %v776 = vadd.f32 %v657, %v775
  %777 = vmatprep.mubr.bf16.mxu0 0
  %778 = vmatmul.mubr.bf16.gmra.mrb[0].mxu0 %v714
  %v779 = vpop.f32.mrb[0].mxu0
  %v780 = vadd.f32 %v662, %v779
  %v781 = vpop.f32.mrb[0].mxu0
  %v782 = vadd.f32 %v662, %v781
  %v783 = vpop.f32.mrb[0].mxu0
  %v784 = vadd.f32 %v667, %v783
  %v785 = vpop.f32.mrb[0].mxu0
  %v786 = vadd.f32 %v667, %v785
  %787 = vmatprep.mubr.bf16.mxu0 0
  %788 = vmatmul.mubr.bf16.gmra.mrb[0].mxu0 %v717
  %v789 = vpop.f32.mrb[0].mxu0
  %v790 = vadd.f32 %v672, %v789
  %v791 = vpop.f32.mrb[0].mxu0
  %v792 = vadd.f32 %v672, %v791
  %v793 = vpop.f32.mrb[0].mxu0
  %v794 = vadd.f32 %v677, %v793
  %v795 = vpop.f32.mrb[0].mxu0
  %v796 = vadd.f32 %v677, %v795
  %797 = vmatprep.mubr.bf16.mxu0 0
  %798 = vmatmul.mubr.bf16.gmra.mrb[0].mxu0 %v720
  %v799 = vpop.f32.mrb[0].mxu0
  %v800 = vadd.f32 %v682, %v799
  %v801 = vpop.f32.mrb[0].mxu0
  %v802 = vadd.f32 %v682, %v801
  %v803 = vpop.f32.mrb[0].mxu0
  %v804 = vadd.f32 %v687, %v803
  %v805 = vpop.f32.mrb[0].mxu0
  %v806 = vadd.f32 %v687, %v805
  %807 = vdwg.mxu0
  %808 = vmatprep.subr.bf16.mxu0 %v616
  %809 = vmatpush1.bf16.msra.mxu0 %v615
  %810 = vmatprep.subr.bf16.mxu0 %v620
  %811 = vmatpush1.bf16.msra.mxu0 %v619
  %812 = vmatprep.subr.bf16.mxu0 %v624
  %813 = vmatpush1.bf16.msra.mxu0 %v623
  %814 = vmatprep.subr.bf16.mxu0 %v628
  %815 = vmatpush1.bf16.msra.mxu0 %v627
  %816 = vmatprep.subr.bf16.mxu0 %v733
  %817 = vmatpush1.bf16.msra.mxu0 %v730
  %818 = vmatprep.subr.bf16.mxu0 0
  %819 = vmatpush1.bf16.msra.mxu0 0
  %820 = vmatprep.subr.bf16.mxu0 0
  %821 = vmatpush1.bf16.msra.mxu0 0
  %822 = vmatprep.subr.bf16.mxu0 0
  %823 = vmatpush1.bf16.msra.mxu0 0
  %824 = vmatprep.subr.bf16.mxu0 0
  %825 = vmatpush1.bf16.msra.mxu0 0
  %826 = vmatprep.subr.bf16.mxu0 0
  %827 = vmatpush1.bf16.msra.mxu0 0
  %828 = vmatprep.subr.bf16.mxu0 0
  %829 = vmatpush1.bf16.msra.mxu0 0
  %830 = vmatprep.subr.bf16.mxu0 0
  %831 = vmatpush1.bf16.msra.mxu0 0
  %832 = vmatprep.subr.bf16.mxu0 0
  %833 = vmatpush1.bf16.msra.mxu0 0
  %834 = vmatprep.subr.bf16.mxu0 0
  %835 = vmatpush1.bf16.msra.mxu0 0
  %836 = vmatprep.subr.bf16.mxu0 0
  %837 = vmatpush1.bf16.msra.mxu0 0
  %838 = vmatprep.subr.bf16.mxu0 0
  %839 = vmatpush1.bf16.msra.mxu0 0
  %840 = vmatprep.mubr.bf16.mxu0 0
  %841 = vmatmul.mubr.bf16.gmra.mrb[0].mxu0 %v711
  %v842 = vpop.f32.mrb[0].mxu0
  %v843 = vadd.f32 %v652, %v842
  %v844 = vpop.f32.mrb[0].mxu0
  %v845 = vadd.f32 %v652, %v844
  %v846 = vpop.f32.mrb[0].mxu0
  %v847 = vadd.f32 %v657, %v846
  %v848 = vpop.f32.mrb[0].mxu0
  %v849 = vadd.f32 %v657, %v848
  %850 = vmatprep.mubr.bf16.mxu0 0
  %851 = vmatmul.mubr.bf16.gmra.mrb[0].mxu0 %v714
  %v852 = vpop.f32.mrb[0].mxu0
  %v853 = vadd.f32 %v662, %v852
  %v854 = vpop.f32.mrb[0].mxu0
  %v855 = vadd.f32 %v662, %v854
  %v856 = vpop.f32.mrb[0].mxu0
  %v857 = vadd.f32 %v667, %v856
  %v858 = vpop.f32.mrb[0].mxu0
  %v859 = vadd.f32 %v667, %v858
  %860 = vmatprep.mubr.bf16.mxu0 0
  %861 = vmatmul.mubr.bf16.gmra.mrb[0].mxu0 %v717
  %v862 = vpop.f32.mrb[0].mxu0
  %v863 = vadd.f32 %v672, %v862
  %v864 = vpop.f32.mrb[0].mxu0
  %v865 = vadd.f32 %v672, %v864
  %v866 = vpop.f32.mrb[0].mxu0
  %v867 = vadd.f32 %v677, %v866
  %v868 = vpop.f32.mrb[0].mxu0
  %v869 = vadd.f32 %v677, %v868
  %870 = vmatprep.mubr.bf16.mxu0 0
  %871 = vmatmul.mubr.bf16.gmra.mrb[0].mxu0 %v720
  %v872 = vpop.f32.mrb[0].mxu0
  %v873 = vadd.f32 %v682, %v872
  %v874 = vpop.f32.mrb[0].mxu0
  %v875 = vadd.f32 %v682, %v874
  %v876 = vpop.f32.mrb[0].mxu0
  %v877 = vadd.f32 %v687, %v876
  %v878 = vpop.f32.mrb[0].mxu0
  %v879 = vadd.f32 %v687, %v878
  %880 = vdwg.mxu0
  %v881 = vmax.f32 %v770, 0.0
  %v882 = vmax.f32 %v772, 0.0
  %v883 = vmax.f32 %v843, 0.0
  %v884 = vmax.f32 %v845, 0.0
  %v885 = vmax.f32 %v774, 0.0
  %v886 = vmax.f32 %v776, 0.0
  %v887 = vmax.f32 %v847, 0.0
  %v888 = vmax.f32 %v849, 0.0
  %v889 = vmax.f32 %v780, 0.0
  %v890 = vmax.f32 %v782, 0.0
  %v891 = vmax.f32 %v853, 0.0
  %v892 = vmax.f32 %v855, 0.0
  %v893 = vmax.f32 %v784, 0.0
  %v894 = vmax.f32 %v786, 0.0
  %v895 = vmax.f32 %v857, 0.0
  %v896 = vmax.f32 %v859, 0.0
  %v897 = vmax.f32 %v790, 0.0
  %v898 = vmax.f32 %v792, 0.0
  %v899 = vmax.f32 %v863, 0.0
  %v900 = vmax.f32 %v865, 0.0
  %v901 = vmax.f32 %v794, 0.0
  %v902 = vmax.f32 %v796, 0.0
  %v903 = vmax.f32 %v867, 0.0
  %v904 = vmax.f32 %v869, 0.0
  %v905 = vmax.f32 %v800, 0.0
  %v906 = vmax.f32 %v802, 0.0
  %v907 = vmax.f32 %v873, 0.0
  %v908 = vmax.f32 %v875, 0.0
  %v909 = vmax.f32 %v804, 0.0
  %v910 = vmax.f32 %v806, 0.0
  %v911 = vmax.f32 %v877, 0.0
  %v912 = vmax.f32 %v879, 0.0
  %v913 = vpack.c.bf16 %v885, %v881
  %v914 = vpack.c.bf16 %v886, %v882
  %v915 = vpack.c.bf16 %v887, %v883
  %v916 = vpack.c.bf16 %v888, %v884
  %v917 = vpack.c.bf16 %v893, %v889
  %v918 = vpack.c.bf16 %v894, %v890
  %v919 = vpack.c.bf16 %v895, %v891
  %v920 = vpack.c.bf16 %v896, %v892
  %v921 = vpack.c.bf16 %v901, %v897
  %v922 = vpack.c.bf16 %v902, %v898
  %v923 = vpack.c.bf16 %v903, %v899
  %v924 = vpack.c.bf16 %v904, %v900
  %v925 = vpack.c.bf16 %v909, %v905
  %v926 = vpack.c.bf16 %v910, %v906
  %v927 = vpack.c.bf16 %v911, %v907
  %v928 = vpack.c.bf16 %v912, %v908
  %v937 = vunpack.c.l.b16 %v913
  %v938 = vunpack.c.l.b16 %v914
  %v939 = vunpack.c.h.b16 %v913
  %v940 = vunpack.c.h.b16 %v914
  %v941 = vunpack.c.l.b16 %v917
  %v942 = vunpack.c.l.b16 %v918
  %v943 = vunpack.c.h.b16 %v917
  %v944 = vunpack.c.h.b16 %v918
  %v945 = vunpack.c.l.b16 %v921
  %v946 = vunpack.c.l.b16 %v922
  %v947 = vunpack.c.h.b16 %v921
  %v948 = vunpack.c.h.b16 %v922
  %v949 = vunpack.c.l.b16 %v925
  %v950 = vunpack.c.l.b16 %v926
  %v951 = vunpack.c.h.b16 %v925
  %v952 = vunpack.c.h.b16 %v926
  %v953 = vpack.c.b16 %v938, %v937
  %v954 = vpack.c.b16 %v940, %v939
  %v955 = vpack.c.b16 %v942, %v941
  %v956 = vpack.c.b16 %v944, %v943
  %v957 = vpack.c.b16 %v946, %v945
  %v958 = vpack.c.b16 %v948, %v947
  %v959 = vpack.c.b16 %v950, %v949
  %v960 = vpack.c.b16 %v952, %v951
  %969 = vst [vmem:[%s5] sm:$0xff] %v953
  %970 = vst [vmem:[%s5 + $0x8] sm:$0xff] %v954
  %971 = vst [vmem:[%s5 + $0x10] sm:$0xff] %v955
  %972 = vst [vmem:[%s5 + $0x18] sm:$0xff] %v956
  %973 = vst [vmem:[%s5 + $0x20] sm:$0xff] %v957
  %974 = vst [vmem:[%s5 + $0x28] sm:$0xff] %v958
  %975 = vst [vmem:[%s5 + $0x30] sm:$0xff] %v959
  %976 = vst [vmem:[%s5 + $0x38] sm:$0xff] %v960
  %v985 = vunpack.c.l.b16 %v915
  %v986 = vunpack.c.l.b16 %v916
  %v987 = vunpack.c.h.b16 %v915
  %v988 = vunpack.c.h.b16 %v916
  %v989 = vunpack.c.l.b16 %v919
  %v990 = vunpack.c.l.b16 %v920
  %v991 = vunpack.c.h.b16 %v919
  %v992 = vunpack.c.h.b16 %v920
  %v993 = vunpack.c.l.b16 %v923
  %v994 = vunpack.c.l.b16 %v924
  %v995 = vunpack.c.h.b16 %v923
  %v996 = vunpack.c.h.b16 %v924
  %v997 = vunpack.c.l.b16 %v927
  %v998 = vunpack.c.l.b16 %v928
  %v999 = vunpack.c.h.b16 %v927
  %v1000 = vunpack.c.h.b16 %v928
  %v1001 = vpack.c.b16 %v986, %v985
  %v1002 = vpack.c.b16 %v988, %v987
  %v1003 = vpack.c.b16 %v990, %v989
  %v1004 = vpack.c.b16 %v992, %v991
  %v1005 = vpack.c.b16 %v994, %v993
  %v1006 = vpack.c.b16 %v996, %v995
  %v1007 = vpack.c.b16 %v998, %v997
  %v1008 = vpack.c.b16 %v1000, %v999
  %s1017 = scalar_lea.vmem %s5, 64
  %1018 = vst [vmem:[%s1017] sm:$0xff] %v1001
  %1019 = vst [vmem:[%s1017 + $0x8] sm:$0xff] %v1002
  %1020 = vst [vmem:[%s1017 + $0x10] sm:$0xff] %v1003
  %1021 = vst [vmem:[%s1017 + $0x18] sm:$0xff] %v1004
  %1022 = vst [vmem:[%s1017 + $0x20] sm:$0xff] %v1005
  %1023 = vst [vmem:[%s1017 + $0x28] sm:$0xff] %v1006
  %1024 = vst [vmem:[%s1017 + $0x30] sm:$0xff] %v1007
  %1025 = vst [vmem:[%s1017 + $0x38] sm:$0xff] %v1008
  // Predicated region
  $region22: #{encoder_forward.1} parent=0 // pred_check
    _
  $region23: #{encoder_forward.1} parent=0 // pred_check_branch
    %1027 = sbr.rel (0) target = $region25
  $region24: #{encoder_forward.1} parent=0 // pred_region
    _
  $region25: #{encoder_forward.1} parent=0 // pred_fallthru
    _
  // Predicated region
  $region26: #{encoder_forward.1} parent=0 // pred_check
    _
  $region27: #{encoder_forward.1} parent=0 // pred_check_branch
    %1029 = sbr.rel (0) target = $region29
  $region28: #{encoder_forward.1} parent=0 // pred_region
    _
  $region29: #{encoder_forward.1} parent=0 // pred_fallthru
    _

</llo_original>
